<compile_context>
chip_gen: v7x
topology: tpu7x:2x2x1
jax: 0.10.0
libtpu: 0.0.40
codegen_flags: <defaults>
</compile_context>

<pallas_src>
import functools

import jax
import jax.numpy as jnp
from jax.experimental import pallas as pl
from jax.experimental.pallas import tpu as pltpu

# Module-consistent small sizes: 8 points, 4 input features, hidden 32, 3 classes.
N, D_IN, H, D_OUT = 8, 4, 32, 3

LANE = 128      # TPU lane width
H_PAD = 128     # hidden dim padded to lane width inside the param slab
NEG = -1e30     # finite "-inf" for padded class lanes -> softmax prob exactly 0


def _round_up(x, m):
    return (x + m - 1) // m * m


def _slab_layout(d_in):
    """Row offsets of w1 / b1 / w2 / b2 inside the packed (rows, 128) slab."""
    row_w1 = 0
    row_b1 = _round_up(max(d_in, 1), 8)     # sublane-aligned row for b1
    row_w2 = row_b1 + 8                     # sublane-aligned start of w2
    row_b2 = row_w2 + H_PAD
    rows = row_b2 + 8
    return row_w1, row_b1, row_w2, row_b2, rows


def pack_params(w1, b1, w2, b2):
    """One-time packing of (w1, b1, w2, b2) into a lane-dense (rows, 128) slab.

    w1: (D_in, H) in (in, out) layout, b1: (1, H), w2: (H, D_out), b2: (1, D_out).
    All padding rows/lanes are exactly zero, so the 128-wide hidden path and the
    128-wide logits inside the kernel are algebraically identical to the H /
    D_out wide reference computation. Call once at init and reuse the slab.
    """
    d_in, h = w1.shape
    d_out = w2.shape[1]
    assert h <= H_PAD and d_out <= LANE
    row_w1, row_b1, row_w2, row_b2, rows = _slab_layout(d_in)

    slab = jnp.zeros((rows, LANE), jnp.float32)
    slab = slab.at[row_w1:row_w1 + d_in, :h].set(w1.astype(jnp.float32))
    slab = slab.at[row_b1, :h].set(jnp.reshape(b1, (h,)).astype(jnp.float32))
    slab = slab.at[row_w2:row_w2 + h, :d_out].set(w2.astype(jnp.float32))
    slab = slab.at[row_b2, :d_out].set(jnp.reshape(b2, (d_out,)).astype(jnp.float32))
    return slab


def _mlp_softmax_kernel(x_ref, p_ref, o_ref, *, d_in, d_out,
                        row_b1, row_w2, row_b2):
    prec = jax.lax.Precision.HIGHEST   # exact f32 matmuls; tiny K, kernel is mem-bound

    x = x_ref[...]                                 # (tile_n, d_in)
    w1 = p_ref[0:d_in, :]                          # (d_in, 128), zero-padded cols
    b1 = p_ref[row_b1:row_b1 + 1, :]               # (1, 128), zero-padded
    w2 = p_ref[row_w2:row_w2 + H_PAD, :]           # (128, 128), zero-padded
    b2 = p_ref[row_b2:row_b2 + 1, :]               # (1, 128), zero-padded

    # Linear 1 + ReLU + the "useless" +1 bias. Padded hidden lanes become
    # relu(0) + 1 = 1 but multiply all-zero w2 rows, so they contribute nothing.
    hdn = jnp.dot(x, w1, preferred_element_type=jnp.float32, precision=prec) + b1
    hdn = jnp.maximum(hdn, 0.0) + 1.0

    # Linear 2 -> lane-dense logits; pin padded class lanes to -1e30 so the
    # 128-lane softmax equals a softmax over the real d_out classes.
    logits = jnp.dot(hdn, w2, preferred_element_type=jnp.float32, precision=prec) + b2
    lane = jax.lax.broadcasted_iota(jnp.int32, logits.shape, 1)
    logits = jnp.where(lane < d_out, logits, NEG)

    # Numerically stable softmax with an exact divide (VALU has plenty of slack).
    m = jnp.max(logits, axis=-1, keepdims=True)
    e = jnp.exp(logits - m)
    s = jnp.sum(e, axis=-1, keepdims=True)
    probs = e / s

    o_ref[...] = probs[:, :d_out].astype(o_ref.dtype)


def points_classification_forward(x, packed_params, d_out, *, tile_n=1024):
    """Fused Linear -> ReLU -> (+1 bias) -> Linear -> softmax forward pass."""
    n, d_in = x.shape
    _, row_b1, row_w2, row_b2, rows = _slab_layout(d_in)
    assert packed_params.shape == (rows, LANE)

    # Biggest row tile that is still small vs. VMEM, but keep >= 2 grid steps
    # when N allows it so both v7x TensorCores get work on the parallel axis.
    tile_n = max(8, min(tile_n, _round_up(pl.cdiv(n, 2), 8)))
    grid = (pl.cdiv(n, tile_n),)

    kernel = functools.partial(
        _mlp_softmax_kernel, d_in=d_in, d_out=d_out,
        row_b1=row_b1, row_w2=row_w2, row_b2=row_b2)

    return pl.pallas_call(
        kernel,
        out_shape=jax.ShapeDtypeStruct((n, d_out), jnp.float32),
        grid=grid,
        in_specs=[
            pl.BlockSpec((tile_n, d_in), lambda i: (i, 0)),   # X row tile
            pl.BlockSpec((rows, LANE), lambda i: (0, 0)),     # resident param slab
        ],
        out_specs=pl.BlockSpec((tile_n, d_out), lambda i: (i, 0)),
        compiler_params=pltpu.CompilerParams(
            dimension_semantics=("parallel",)),
        cost_estimate=pl.CostEstimate(
            flops=2 * n * (d_in * H_PAD + H_PAD * LANE) + 6 * n * LANE,
            transcendentals=n * LANE,
            bytes_accessed=4 * (n * d_in + rows * LANE + n * d_out),
        ),
    )(x, packed_params)


def _reference(x, w1, b1, w2, b2):
    prec = jax.lax.Precision.HIGHEST
    hdn = jnp.maximum(jnp.dot(x, w1, precision=prec) + b1, 0.0)
    hdn = hdn + 1.0                       # my_useless_bias = ones(1, H)
    logits = jnp.dot(hdn, w2, precision=prec) + b2
    return jax.nn.softmax(logits, axis=-1)


if __name__ == "__main__":
    key = jax.random.PRNGKey(0)
    kx, k1, kb1, k2, kb2 = jax.random.split(key, 5)

    x = jax.random.normal(kx, (N, D_IN), dtype=jnp.float32)
    # nn.Linear weights, pre-transposed to (in, out) layout.
    w1 = jax.random.normal(k1, (D_IN, H), dtype=jnp.float32) * (1.0 / jnp.sqrt(D_IN))
    b1 = jax.random.normal(kb1, (1, H), dtype=jnp.float32) * 0.1
    w2 = jax.random.normal(k2, (H, D_OUT), dtype=jnp.float32) * (1.0 / jnp.sqrt(H))
    b2 = jax.random.normal(kb2, (1, D_OUT), dtype=jnp.float32) * 0.1

    # Pack parameters ONCE (init-time), not per forward call.
    packed = jax.block_until_ready(pack_params(w1, b1, w2, b2))

    out = points_classification_forward(x, packed, D_OUT)
    out = jax.block_until_ready(out)

    ref = _reference(x, w1, b1, w2, b2)
    assert out.shape == (N, D_OUT)
    assert bool(jnp.allclose(out, ref, atol=5e-4, rtol=5e-4)), "mismatch vs reference"
    assert bool(jnp.allclose(jnp.sum(out, axis=-1), 1.0, atol=1e-5)), \
        "softmax rows must sum to 1"

    print("KERNEL_OK")
</pallas_src>

<mosaic_0001>
module attributes {stable_mosaic.version = 11 : i64} {
  func.func @_mlp_softmax_kernel(%arg0: i32, %arg1: memref<8x4xf32, #tpu.memory_space<vmem>>, %arg2: memref<152x128xf32, #tpu.memory_space<vmem>>, %arg3: memref<8x3xf32, #tpu.memory_space<vmem>>) attributes {dimension_semantics = [#tpu.dimension_semantics<parallel>], iteration_bounds = array<i64: 1>, scalar_prefetch = 0 : i64, scratch_operands = 0 : i64, tpu.core_type = #tpu.core_type<tc>, window_params = [{transform_indices = @transform_0, window_bounds = array<i64: 8, 4>}, {pipeline_mode = #tpu.pipeline_mode<synchronous>, transform_indices = @transform_1, window_bounds = array<i64: 152, 128>}, {transform_indices = @transform_2, window_bounds = array<i64: 8, 3>}]} {
    %c0 = arith.constant 0 : index
    %c0_0 = arith.constant 0 : index
    %0 = vector.load %arg1[%c0, %c0_0] : memref<8x4xf32, #tpu.memory_space<vmem>>, vector<8x4xf32>
    %c0_1 = arith.constant 0 : index
    %c0_2 = arith.constant 0 : index
    %1 = vector.load %arg2[%c0_1, %c0_2] : memref<152x128xf32, #tpu.memory_space<vmem>>, vector<4x128xf32>
    %c8 = arith.constant 8 : index
    %c0_3 = arith.constant 0 : index
    %2 = vector.load %arg2[%c8, %c0_3] : memref<152x128xf32, #tpu.memory_space<vmem>>, vector<1x128xf32>
    %c16 = arith.constant 16 : index
    %c0_4 = arith.constant 0 : index
    %3 = vector.load %arg2[%c16, %c0_4] : memref<152x128xf32, #tpu.memory_space<vmem>>, vector<128x128xf32>
    %c144 = arith.constant 144 : index
    %c0_5 = arith.constant 0 : index
    %4 = vector.load %arg2[%c144, %c0_5] : memref<152x128xf32, #tpu.memory_space<vmem>>, vector<1x128xf32>
    %cst = arith.constant dense<0.000000e+00> : vector<8x128xf32>
    %5 = tpu.matmul %0, %1, %cst {dimension_numbers = #tpu.dot_dimension_numbers<[1], [0], [0], [1], [0, 0, 1, 1], [], []>, precision = #tpu.contract_precision<fp32>} : vector<8x4xf32>, vector<4x128xf32>, vector<8x128xf32> -> vector<8x128xf32>
    %6 = vector.broadcast %2 : vector<1x128xf32> to vector<8x128xf32>
    %7 = arith.addf %5, %6 : vector<8x128xf32>
    %cst_6 = arith.constant 0.000000e+00 : f32
    %8 = vector.broadcast %cst_6 : f32 to vector<8x128xf32>
    %9 = arith.maximumf %7, %8 : vector<8x128xf32>
    %cst_7 = arith.constant 1.000000e+00 : f32
    %10 = vector.broadcast %cst_7 : f32 to vector<8x128xf32>
    %11 = arith.addf %9, %10 : vector<8x128xf32>
    %cst_8 = arith.constant dense<0.000000e+00> : vector<8x128xf32>
    %12 = tpu.matmul %11, %3, %cst_8 {dimension_numbers = #tpu.dot_dimension_numbers<[1], [0], [0], [1], [0, 0, 1, 1], [], []>, precision = #tpu.contract_precision<fp32>} : vector<8x128xf32>, vector<128x128xf32>, vector<8x128xf32> -> vector<8x128xf32>
    %13 = vector.broadcast %4 : vector<1x128xf32> to vector<8x128xf32>
    %14 = arith.addf %12, %13 : vector<8x128xf32>
    %15 = tpu.iota {dimensions = array<i32: 1>} : vector<8x128xi32>
    %c3_i32 = arith.constant 3 : i32
    %16 = vector.broadcast %c3_i32 : i32 to vector<8x128xi32>
    %17 = arith.cmpi slt, %15, %16 : vector<8x128xi32>
    %cst_9 = arith.constant -1.000000e+30 : f32
    %18 = vector.broadcast %cst_9 : f32 to vector<8x128xf32>
    %19 = arith.select %17, %14, %18 : vector<8x128xi1>, vector<8x128xf32>
    %cst_10 = arith.constant dense<0xFF800000> : vector<8xf32>
    %20 = vector.multi_reduction <maximumf>, %19, %cst_10 [1] : vector<8x128xf32> to vector<8xf32>
    %21 = vector.shape_cast %20 : vector<8xf32> to vector<8x1xf32>
    %22 = vector.broadcast %21 : vector<8x1xf32> to vector<8x128xf32>
    %23 = arith.subf %19, %22 : vector<8x128xf32>
    %24 = math.exp %23 : vector<8x128xf32>
    %cst_11 = arith.constant dense<0.000000e+00> : vector<8xf32>
    %25 = vector.multi_reduction <add>, %24, %cst_11 [1] : vector<8x128xf32> to vector<8xf32>
    %26 = vector.shape_cast %25 : vector<8xf32> to vector<8x1xf32>
    %27 = vector.broadcast %26 : vector<8x1xf32> to vector<8x128xf32>
    %28 = arith.divf %24, %27 : vector<8x128xf32>
    %29 = vector.extract_strided_slice %28 {offsets = [0, 0], sizes = [8, 3], strides = [1, 1]} : vector<8x128xf32> to vector<8x3xf32>
    %c0_12 = arith.constant 0 : index
    %c0_13 = arith.constant 0 : index
    %30 = vector.load %arg3[%c0_12, %c0_13] : memref<8x3xf32, #tpu.memory_space<vmem>>, vector<8x3xf32>
    tpu.vector_store %arg3[%c0_12, %c0_13], %29 {strides = array<i32>} : memref<8x3xf32, #tpu.memory_space<vmem>>, vector<8x3xf32>,
    return
  }
  func.func @transform_0(%arg0: i32) -> (i32, i32) {
    %c0_i32 = arith.constant 0 : i32
    %c0_i32_0 = arith.constant 0 : i32
    return %arg0, %c0_i32 : i32, i32
  }
  func.func @transform_1(%arg0: i32) -> (i32, i32) {
    %c0_i32 = arith.constant 0 : i32
    %c0_i32_0 = arith.constant 0 : i32
    %c0_i32_1 = arith.constant 0 : i32
    return %c0_i32, %c0_i32_0 : i32, i32
  }
  func.func @transform_2(%arg0: i32) -> (i32, i32) {
    %c0_i32 = arith.constant 0 : i32
    %c0_i32_0 = arith.constant 0 : i32
    return %arg0, %c0_i32 : i32, i32
  }
}

</mosaic_0001>

<llo_original>
// kernel: tpu_custom_call.1
$region0: #{tpu_custom_call.1}
  #allocation0 [shape = 'u32[]', space=smem, size = 0x4, offset = 0x4, fixed_abs, tag = 'smem constant byte address 0x4 - core index']
  #allocation1 [shape = 'u32[144,128]{1,0:T(1,128)}', space=vmem, size = 0x12000, scoped, tag = 'internal scratch']
  %s0 = inlined_call_operand.vmem [shape: f32[8,4], index: 0, kind: input, shape index: {}]
  %s1 = inlined_call_operand.hbm [shape: f32[152,128], index: 1, kind: input, shape index: {}]
  %s2 = inlined_call_operand.vmem [shape: f32[8,3], index: 2, kind: output, shape index: {}]
  %s3 = sld [smem:[#allocation0]]
  $region22: #{tpu_custom_call.1} parent=0
    _
  %s5 = ssub.s32 1, %s3
  %s6 = scalar_select 0, %s5, %s3
  $region1: #{tpu_custom_call.1} parent=0
    #allocation2 [shape = 'u8[77824]{0}', space=vmem, size = 0x13000, scoped, tag = 'input window, operand 1, single buffered']
    #allocation3 [shape = 's32[1]{0}', space=sflag, size = 0x4, scoped, tag = 'scoped memory for tpu_custom_call.1']
    %7 = vsyncpa [#allocation3], 0
    // Predicated region
    $region2: #{tpu_custom_call.1} parent=1 // pred_check
      _
    $region3: #{tpu_custom_call.1} parent=1 // pred_check_branch
      %9 = sbr.rel (0) target = $region5
    $region4: #{tpu_custom_call.1} parent=1 // pred_region
      _
    $region5: #{tpu_custom_call.1} parent=1 // pred_fallthru
      _
    // Predicated region
    $region6: #{tpu_custom_call.1} parent=1 // pred_check
      _
    $region7: #{tpu_custom_call.1} parent=1 // pred_check_branch
      %11 = sbr.rel (0) target = $region9
    $region8: #{tpu_custom_call.1} parent=1 // pred_region
      %s13 = ssub.s32 2432, 2432
      %14 = vsyncadd [#allocation3], %s13
      %s15 = sshll.u32 [#allocation2], 4
      %s16 = int_to_ptr.vmem [resolvable:$true] %s15
      %21 = dma.hbm_to_vmem [thread:$0]  %s1, 2432, %s16, [#allocation3], 128, 128, 8
    $region9: #{tpu_custom_call.1} parent=1 // pred_fallthru
      _
    // Predicated region
    $region10: #{tpu_custom_call.1} parent=1 // pred_check
      _
    $region11: #{tpu_custom_call.1} parent=1 // pred_check_branch
      %23 = sbr.rel (0) target = $region13
    $region12: #{tpu_custom_call.1} parent=1 // pred_region
      %24 = dma.done [#allocation3], 2432
    $region13: #{tpu_custom_call.1} parent=1 // pred_fallthru
      _
    %v25 = vld [vmem:[%s0] sm:$0xff]
    %v26 = vld [vmem:[#allocation2] sm:$0xf]
    %v27 = vld [vmem:[#allocation2 + $0x8] sm:$0x1]
    %v28 = vld [vmem:[#allocation2 + $0x10] sm:$0xff]
    %v29 = vld [vmem:[#allocation2 + $0x18] sm:$0xff]
    %v30 = vld [vmem:[#allocation2 + $0x20] sm:$0xff]
    %v31 = vld [vmem:[#allocation2 + $0x28] sm:$0xff]
    %v32 = vld [vmem:[#allocation2 + $0x30] sm:$0xff]
    %v33 = vld [vmem:[#allocation2 + $0x38] sm:$0xff]
    %v34 = vld [vmem:[#allocation2 + $0x40] sm:$0xff]
    %v35 = vld [vmem:[#allocation2 + $0x48] sm:$0xff]
    %v36 = vld [vmem:[#allocation2 + $0x50] sm:$0xff]
    %v37 = vld [vmem:[#allocation2 + $0x58] sm:$0xff]
    %v38 = vld [vmem:[#allocation2 + $0x60] sm:$0xff]
    %v39 = vld [vmem:[#allocation2 + $0x68] sm:$0xff]
    %v40 = vld [vmem:[#allocation2 + $0x70] sm:$0xff]
    %v41 = vld [vmem:[#allocation2 + $0x78] sm:$0xff]
    %v42 = vld [vmem:[#allocation2 + $0x80] sm:$0xff]
    %v43 = vld [vmem:[#allocation2 + $0x88] sm:$0xff]
    %v44 = vld [vmem:[#allocation2 + $0x90] sm:$0x1]
    %v45 = vlaneseq
    %v46 = vshrl.u32 %v45, 7
    %v47 = vsub.s32 0, %v46
    %v48 = vrot.slane %v27, %v47
    %vm49 = vcmask 31744
    %v51 = vsel %vm49, %v25, 0
    %vm53 = vcmask 1043456
    %v55 = vsel %vm53, %v26, 0
    %57 = vmatprep.subr.mxu0 0.0
    %v58 = vand.u32 %v55, 4294901760
    %59 = vmatpush1.msra.mxu0 %v58
    %60 = vmatprep.subr.mxu0 0.0
    %61 = vmatpush1.msra.mxu0 0.0
    %62 = vmatprep.subr.mxu0 0.0
    %63 = vmatpush1.msra.mxu0 0.0
    %64 = vmatprep.subr.mxu0 0.0
    %65 = vmatpush1.msra.mxu0 0.0
    %66 = vmatprep.subr.mxu0 0.0
    %67 = vmatpush1.msra.mxu0 0.0
    %68 = vmatprep.subr.mxu0 0.0
    %69 = vmatpush1.msra.mxu0 0.0
    %70 = vmatprep.subr.mxu0 0.0
    %71 = vmatpush1.msra.mxu0 0.0
    %72 = vmatprep.subr.mxu0 0.0
    %73 = vmatpush1.msra.mxu0 0.0
    %74 = vmatprep.subr.mxu0 0.0
    %75 = vmatpush1.msra.mxu0 0.0
    %76 = vmatprep.subr.mxu0 0.0
    %77 = vmatpush1.msra.mxu0 0.0
    %78 = vmatprep.subr.mxu0 0.0
    %79 = vmatpush1.msra.mxu0 0.0
    %80 = vmatprep.subr.mxu0 0.0
    %81 = vmatpush1.msra.mxu0 0.0
    %82 = vmatprep.subr.mxu0 0.0
    %83 = vmatpush1.msra.mxu0 0.0
    %84 = vmatprep.subr.mxu0 0.0
    %85 = vmatpush1.msra.mxu0 0.0
    %86 = vmatprep.subr.mxu0 0.0
    %87 = vmatpush1.msra.mxu0 0.0
    %88 = vmatprep.subr.mxu0 0.0
    %89 = vmatpush1.msra.mxu0 0.0
    %90 = vmatprep.subr.mxu0 0.0
    %91 = vmatpush1.msra.mxu0 0.0
    %92 = vmatprep.subr.mxu0 0.0
    %93 = vmatpush1.msra.mxu0 0.0
    %94 = vmatprep.subr.mxu0 0.0
    %95 = vmatpush1.msra.mxu0 0.0
    %96 = vmatprep.subr.mxu0 0.0
    %97 = vmatpush1.msra.mxu0 0.0
    %98 = vmatprep.subr.mxu0 0.0
    %99 = vmatpush1.msra.mxu0 0.0
    %100 = vmatprep.subr.mxu0 0.0
    %101 = vmatpush1.msra.mxu0 0.0
    %102 = vmatprep.subr.mxu0 0.0
    %103 = vmatpush1.msra.mxu0 0.0
    %104 = vmatprep.subr.mxu0 0.0
    %105 = vmatpush1.msra.mxu0 0.0
    %106 = vmatprep.subr.mxu0 0.0
    %107 = vmatpush1.msra.mxu0 0.0
    %108 = vmatprep.subr.mxu0 0.0
    %109 = vmatpush1.msra.mxu0 0.0
    %110 = vmatprep.subr.mxu0 0.0
    %111 = vmatpush1.msra.mxu0 0.0
    %112 = vmatprep.subr.mxu0 0.0
    %113 = vmatpush1.msra.mxu0 0.0
    %114 = vmatprep.subr.mxu0 0.0
    %115 = vmatpush1.msra.mxu0 0.0
    %116 = vmatprep.subr.mxu0 0.0
    %117 = vmatpush1.msra.mxu0 0.0
    %118 = vmatprep.subr.mxu0 0.0
    %119 = vmatpush1.msra.mxu0 0.0
    %120 = vmatprep.subr.mxu0 0.0
    %121 = vmatpush1.msra.mxu0 0.0
    %122 = vmatprep.mubr.f32.mxu0 0.0
    %v123 = vand.u32 %v51, 4294901760
    %v124 = vsub.f32 %v51, %v123
    %v125 = vand.u32 %v124, 4294901760
    %v126 = vsub.f32 %v124, %v125
    %v127 = vand.u32 %v126, 4294901760
    %128 = vmatmul.mubr.f32.gmra.mrb[0].mxu0 %v127
    %v129 = vpop.f32.mrb[0].mxu0
    %v130 = vadd.f32 %v48, %v129
    %v131 = vpop.f32.mrb[0].mxu0
    %132 = vdwg.mxu0
    %133 = vmatprep.subr.mxu0 0.0
    %v134 = vand.u32 %v55, 4294901760
    %v135 = vsub.f32 %v55, %v134
    %v136 = vand.u32 %v135, 4294901760
    %v137 = vsub.f32 %v135, %v136
    %v138 = vand.u32 %v137, 4294901760
    %139 = vmatpush1.msra.mxu0 %v138
    %140 = vmatprep.subr.mxu0 0.0
    %141 = vmatpush1.msra.mxu0 0.0
    %142 = vmatprep.subr.mxu0 0.0
    %143 = vmatpush1.msra.mxu0 0.0
    %144 = vmatprep.subr.mxu0 0.0
    %145 = vmatpush1.msra.mxu0 0.0
    %146 = vmatprep.subr.mxu0 0.0
    %147 = vmatpush1.msra.mxu0 0.0
    %148 = vmatprep.subr.mxu0 0.0
    %149 = vmatpush1.msra.mxu0 0.0
    %150 = vmatprep.subr.mxu0 0.0
    %151 = vmatpush1.msra.mxu0 0.0
    %152 = vmatprep.subr.mxu0 0.0
    %153 = vmatpush1.msra.mxu0 0.0
    %154 = vmatprep.subr.mxu0 0.0
    %155 = vmatpush1.msra.mxu0 0.0
    %156 = vmatprep.subr.mxu0 0.0
    %157 = vmatpush1.msra.mxu0 0.0
    %158 = vmatprep.subr.mxu0 0.0
    %159 = vmatpush1.msra.mxu0 0.0
    %160 = vmatprep.subr.mxu0 0.0
    %161 = vmatpush1.msra.mxu0 0.0
    %162 = vmatprep.subr.mxu0 0.0
    %163 = vmatpush1.msra.mxu0 0.0
    %164 = vmatprep.subr.mxu0 0.0
    %165 = vmatpush1.msra.mxu0 0.0
    %166 = vmatprep.subr.mxu0 0.0
    %167 = vmatpush1.msra.mxu0 0.0
    %168 = vmatprep.subr.mxu0 0.0
    %169 = vmatpush1.msra.mxu0 0.0
    %170 = vmatprep.subr.mxu0 0.0
    %171 = vmatpush1.msra.mxu0 0.0
    %172 = vmatprep.subr.mxu0 0.0
    %173 = vmatpush1.msra.mxu0 0.0
    %174 = vmatprep.subr.mxu0 0.0
    %175 = vmatpush1.msra.mxu0 0.0
    %176 = vmatprep.subr.mxu0 0.0
    %177 = vmatpush1.msra.mxu0 0.0
    %178 = vmatprep.subr.mxu0 0.0
    %179 = vmatpush1.msra.mxu0 0.0
    %180 = vmatprep.subr.mxu0 0.0
    %181 = vmatpush1.msra.mxu0 0.0
    %182 = vmatprep.subr.mxu0 0.0
    %183 = vmatpush1.msra.mxu0 0.0
    %184 = vmatprep.subr.mxu0 0.0
    %185 = vmatpush1.msra.mxu0 0.0
    %186 = vmatprep.subr.mxu0 0.0
    %187 = vmatpush1.msra.mxu0 0.0
    %188 = vmatprep.subr.mxu0 0.0
    %189 = vmatpush1.msra.mxu0 0.0
    %190 = vmatprep.subr.mxu0 0.0
    %191 = vmatpush1.msra.mxu0 0.0
    %192 = vmatprep.subr.mxu0 0.0
    %193 = vmatpush1.msra.mxu0 0.0
    %194 = vmatprep.subr.mxu0 0.0
    %195 = vmatpush1.msra.mxu0 0.0
    %196 = vmatprep.subr.mxu0 0.0
    %197 = vmatpush1.msra.mxu0 0.0
    %198 = vmatprep.subr.mxu0 0.0
    %199 = vmatpush1.msra.mxu0 0.0
    %200 = vmatprep.subr.mxu0 0.0
    %201 = vmatpush1.msra.mxu0 0.0
    %202 = vmatprep.mubr.f32.mxu0 0.0
    %v203 = vand.u32 %v51, 4294901760
    %204 = vmatmul.mubr.f32.gmra.mrb[0].mxu0 %v203
    %v205 = vpop.f32.mrb[0].mxu0
    %v206 = vadd.f32 %v130, %v205
    %v207 = vpop.f32.mrb[0].mxu0
    %208 = vdwg.mxu0
    %209 = vmatprep.subr.mxu0 0.0
    %v210 = vand.u32 %v55, 4294901760
    %v211 = vsub.f32 %v55, %v210
    %212 = vmatpush1.msra.mxu0 %v211
    %213 = vmatprep.subr.mxu0 0.0
    %214 = vmatpush1.msra.mxu0 0.0
    %215 = vmatprep.subr.mxu0 0.0
    %216 = vmatpush1.msra.mxu0 0.0
    %217 = vmatprep.subr.mxu0 0.0
    %218 = vmatpush1.msra.mxu0 0.0
    %219 = vmatprep.subr.mxu0 0.0
    %220 = vmatpush1.msra.mxu0 0.0
    %221 = vmatprep.subr.mxu0 0.0
    %222 = vmatpush1.msra.mxu0 0.0
    %223 = vmatprep.subr.mxu0 0.0
    %224 = vmatpush1.msra.mxu0 0.0
    %225 = vmatprep.subr.mxu0 0.0
    %226 = vmatpush1.msra.mxu0 0.0
    %227 = vmatprep.subr.mxu0 0.0
    %228 = vmatpush1.msra.mxu0 0.0
    %229 = vmatprep.subr.mxu0 0.0
    %230 = vmatpush1.msra.mxu0 0.0
    %231 = vmatprep.subr.mxu0 0.0
    %232 = vmatpush1.msra.mxu0 0.0
    %233 = vmatprep.subr.mxu0 0.0
    %234 = vmatpush1.msra.mxu0 0.0
    %235 = vmatprep.subr.mxu0 0.0
    %236 = vmatpush1.msra.mxu0 0.0
    %237 = vmatprep.subr.mxu0 0.0
    %238 = vmatpush1.msra.mxu0 0.0
    %239 = vmatprep.subr.mxu0 0.0
    %240 = vmatpush1.msra.mxu0 0.0
    %241 = vmatprep.subr.mxu0 0.0
    %242 = vmatpush1.msra.mxu0 0.0
    %243 = vmatprep.subr.mxu0 0.0
    %244 = vmatpush1.msra.mxu0 0.0
    %245 = vmatprep.subr.mxu0 0.0
    %246 = vmatpush1.msra.mxu0 0.0
    %247 = vmatprep.subr.mxu0 0.0
    %248 = vmatpush1.msra.mxu0 0.0
    %249 = vmatprep.subr.mxu0 0.0
    %250 = vmatpush1.msra.mxu0 0.0
    %251 = vmatprep.subr.mxu0 0.0
    %252 = vmatpush1.msra.mxu0 0.0
    %253 = vmatprep.subr.mxu0 0.0
    %254 = vmatpush1.msra.mxu0 0.0
    %255 = vmatprep.subr.mxu0 0.0
    %256 = vmatpush1.msra.mxu0 0.0
    %257 = vmatprep.subr.mxu0 0.0
    %258 = vmatpush1.msra.mxu0 0.0
    %259 = vmatprep.subr.mxu0 0.0
    %260 = vmatpush1.msra.mxu0 0.0
    %261 = vmatprep.subr.mxu0 0.0
    %262 = vmatpush1.msra.mxu0 0.0
    %263 = vmatprep.subr.mxu0 0.0
    %264 = vmatpush1.msra.mxu0 0.0
    %265 = vmatprep.subr.mxu0 0.0
    %266 = vmatpush1.msra.mxu0 0.0
    %267 = vmatprep.subr.mxu0 0.0
    %268 = vmatpush1.msra.mxu0 0.0
    %269 = vmatprep.subr.mxu0 0.0
    %270 = vmatpush1.msra.mxu0 0.0
    %271 = vmatprep.subr.mxu0 0.0
    %272 = vmatpush1.msra.mxu0 0.0
    %273 = vmatprep.subr.mxu0 0.0
    %274 = vmatpush1.msra.mxu0 0.0
    %275 = vmatprep.mubr.f32.mxu0 0.0
    %v276 = vand.u32 %v51, 4294901760
    %v277 = vsub.f32 %v51, %v276
    %278 = vmatmul.mubr.f32.gmra.mrb[0].mxu0 %v277
    %v279 = vpop.f32.mrb[0].mxu0
    %v280 = vadd.f32 %v206, %v279
    %v281 = vpop.f32.mrb[0].mxu0
    %282 = vdwg.mxu0
    %283 = vmatprep.subr.mxu0 0.0
    %v284 = vand.u32 %v55, 4294901760
    %285 = vmatpush1.msra.mxu0 %v284
    %286 = vmatprep.subr.mxu0 0.0
    %287 = vmatpush1.msra.mxu0 0.0
    %288 = vmatprep.subr.mxu0 0.0
    %289 = vmatpush1.msra.mxu0 0.0
    %290 = vmatprep.subr.mxu0 0.0
    %291 = vmatpush1.msra.mxu0 0.0
    %292 = vmatprep.subr.mxu0 0.0
    %293 = vmatpush1.msra.mxu0 0.0
    %294 = vmatprep.subr.mxu0 0.0
    %295 = vmatpush1.msra.mxu0 0.0
    %296 = vmatprep.subr.mxu0 0.0
    %297 = vmatpush1.msra.mxu0 0.0
    %298 = vmatprep.subr.mxu0 0.0
    %299 = vmatpush1.msra.mxu0 0.0
    %300 = vmatprep.subr.mxu0 0.0
    %301 = vmatpush1.msra.mxu0 0.0
    %302 = vmatprep.subr.mxu0 0.0
    %303 = vmatpush1.msra.mxu0 0.0
    %304 = vmatprep.subr.mxu0 0.0
    %305 = vmatpush1.msra.mxu0 0.0
    %306 = vmatprep.subr.mxu0 0.0
    %307 = vmatpush1.msra.mxu0 0.0
    %308 = vmatprep.subr.mxu0 0.0
    %309 = vmatpush1.msra.mxu0 0.0
    %310 = vmatprep.subr.mxu0 0.0
    %311 = vmatpush1.msra.mxu0 0.0
    %312 = vmatprep.subr.mxu0 0.0
    %313 = vmatpush1.msra.mxu0 0.0
    %314 = vmatprep.subr.mxu0 0.0
    %315 = vmatpush1.msra.mxu0 0.0
    %316 = vmatprep.subr.mxu0 0.0
    %317 = vmatpush1.msra.mxu0 0.0
    %318 = vmatprep.subr.mxu0 0.0
    %319 = vmatpush1.msra.mxu0 0.0
    %320 = vmatprep.subr.mxu0 0.0
    %321 = vmatpush1.msra.mxu0 0.0
    %322 = vmatprep.subr.mxu0 0.0
    %323 = vmatpush1.msra.mxu0 0.0
    %324 = vmatprep.subr.mxu0 0.0
    %325 = vmatpush1.msra.mxu0 0.0
    %326 = vmatprep.subr.mxu0 0.0
    %327 = vmatpush1.msra.mxu0 0.0
    %328 = vmatprep.subr.mxu0 0.0
    %329 = vmatpush1.msra.mxu0 0.0
    %330 = vmatprep.subr.mxu0 0.0
    %331 = vmatpush1.msra.mxu0 0.0
    %332 = vmatprep.subr.mxu0 0.0
    %333 = vmatpush1.msra.mxu0 0.0
    %334 = vmatprep.subr.mxu0 0.0
    %335 = vmatpush1.msra.mxu0 0.0
    %336 = vmatprep.subr.mxu0 0.0
    %337 = vmatpush1.msra.mxu0 0.0
    %338 = vmatprep.subr.mxu0 0.0
    %339 = vmatpush1.msra.mxu0 0.0
    %340 = vmatprep.subr.mxu0 0.0
    %341 = vmatpush1.msra.mxu0 0.0
    %342 = vmatprep.subr.mxu0 0.0
    %343 = vmatpush1.msra.mxu0 0.0
    %344 = vmatprep.subr.mxu0 0.0
    %345 = vmatpush1.msra.mxu0 0.0
    %346 = vmatprep.subr.mxu0 0.0
    %347 = vmatpush1.msra.mxu0 0.0
    %348 = vmatprep.mubr.f32.mxu0 0.0
    %v349 = vand.u32 %v51, 4294901760
    %v350 = vsub.f32 %v51, %v349
    %v351 = vand.u32 %v350, 4294901760
    %352 = vmatmul.mubr.f32.gmra.mrb[0].mxu0 %v351
    %v353 = vpop.f32.mrb[0].mxu0
    %v354 = vadd.f32 %v280, %v353
    %v355 = vpop.f32.mrb[0].mxu0
    %356 = vdwg.mxu0
    %357 = vmatprep.subr.mxu0 0.0
    %v358 = vand.u32 %v55, 4294901760
    %v359 = vsub.f32 %v55, %v358
    %v360 = vand.u32 %v359, 4294901760
    %361 = vmatpush1.msra.mxu0 %v360
    %362 = vmatprep.subr.mxu0 0.0
    %363 = vmatpush1.msra.mxu0 0.0
    %364 = vmatprep.subr.mxu0 0.0
    %365 = vmatpush1.msra.mxu0 0.0
    %366 = vmatprep.subr.mxu0 0.0
    %367 = vmatpush1.msra.mxu0 0.0
    %368 = vmatprep.subr.mxu0 0.0
    %369 = vmatpush1.msra.mxu0 0.0
    %370 = vmatprep.subr.mxu0 0.0
    %371 = vmatpush1.msra.mxu0 0.0
    %372 = vmatprep.subr.mxu0 0.0
    %373 = vmatpush1.msra.mxu0 0.0
    %374 = vmatprep.subr.mxu0 0.0
    %375 = vmatpush1.msra.mxu0 0.0
    %376 = vmatprep.subr.mxu0 0.0
    %377 = vmatpush1.msra.mxu0 0.0
    %378 = vmatprep.subr.mxu0 0.0
    %379 = vmatpush1.msra.mxu0 0.0
    %380 = vmatprep.subr.mxu0 0.0
    %381 = vmatpush1.msra.mxu0 0.0
    %382 = vmatprep.subr.mxu0 0.0
    %383 = vmatpush1.msra.mxu0 0.0
    %384 = vmatprep.subr.mxu0 0.0
    %385 = vmatpush1.msra.mxu0 0.0
    %386 = vmatprep.subr.mxu0 0.0
    %387 = vmatpush1.msra.mxu0 0.0
    %388 = vmatprep.subr.mxu0 0.0
    %389 = vmatpush1.msra.mxu0 0.0
    %390 = vmatprep.subr.mxu0 0.0
    %391 = vmatpush1.msra.mxu0 0.0
    %392 = vmatprep.subr.mxu0 0.0
    %393 = vmatpush1.msra.mxu0 0.0
    %394 = vmatprep.subr.mxu0 0.0
    %395 = vmatpush1.msra.mxu0 0.0
    %396 = vmatprep.subr.mxu0 0.0
    %397 = vmatpush1.msra.mxu0 0.0
    %398 = vmatprep.subr.mxu0 0.0
    %399 = vmatpush1.msra.mxu0 0.0
    %400 = vmatprep.subr.mxu0 0.0
    %401 = vmatpush1.msra.mxu0 0.0
    %402 = vmatprep.subr.mxu0 0.0
    %403 = vmatpush1.msra.mxu0 0.0
    %404 = vmatprep.subr.mxu0 0.0
    %405 = vmatpush1.msra.mxu0 0.0
    %406 = vmatprep.subr.mxu0 0.0
    %407 = vmatpush1.msra.mxu0 0.0
    %408 = vmatprep.subr.mxu0 0.0
    %409 = vmatpush1.msra.mxu0 0.0
    %410 = vmatprep.subr.mxu0 0.0
    %411 = vmatpush1.msra.mxu0 0.0
    %412 = vmatprep.subr.mxu0 0.0
    %413 = vmatpush1.msra.mxu0 0.0
    %414 = vmatprep.subr.mxu0 0.0
    %415 = vmatpush1.msra.mxu0 0.0
    %416 = vmatprep.subr.mxu0 0.0
    %417 = vmatpush1.msra.mxu0 0.0
    %418 = vmatprep.subr.mxu0 0.0
    %419 = vmatpush1.msra.mxu0 0.0
    %420 = vmatprep.subr.mxu0 0.0
    %421 = vmatpush1.msra.mxu0 0.0
    %422 = vmatprep.subr.mxu0 0.0
    %423 = vmatpush1.msra.mxu0 0.0
    %424 = vmatprep.mubr.f32.mxu0 0.0
    %v425 = vand.u32 %v51, 4294901760
    %426 = vmatmul.mubr.f32.gmra.mrb[0].mxu0 %v425
    %v427 = vpop.f32.mrb[0].mxu0
    %v428 = vadd.f32 %v354, %v427
    %v429 = vpop.f32.mrb[0].mxu0
    %430 = vdwg.mxu0
    %431 = vmatprep.subr.mxu0 0.0
    %v432 = vand.u32 %v55, 4294901760
    %433 = vmatpush1.msra.mxu0 %v432
    %434 = vmatprep.subr.mxu0 0.0
    %435 = vmatpush1.msra.mxu0 0.0
    %436 = vmatprep.subr.mxu0 0.0
    %437 = vmatpush1.msra.mxu0 0.0
    %438 = vmatprep.subr.mxu0 0.0
    %439 = vmatpush1.msra.mxu0 0.0
    %440 = vmatprep.subr.mxu0 0.0
    %441 = vmatpush1.msra.mxu0 0.0
    %442 = vmatprep.subr.mxu0 0.0
    %443 = vmatpush1.msra.mxu0 0.0
    %444 = vmatprep.subr.mxu0 0.0
    %445 = vmatpush1.msra.mxu0 0.0
    %446 = vmatprep.subr.mxu0 0.0
    %447 = vmatpush1.msra.mxu0 0.0
    %448 = vmatprep.subr.mxu0 0.0
    %449 = vmatpush1.msra.mxu0 0.0
    %450 = vmatprep.subr.mxu0 0.0
    %451 = vmatpush1.msra.mxu0 0.0
    %452 = vmatprep.subr.mxu0 0.0
    %453 = vmatpush1.msra.mxu0 0.0
    %454 = vmatprep.subr.mxu0 0.0
    %455 = vmatpush1.msra.mxu0 0.0
    %456 = vmatprep.subr.mxu0 0.0
    %457 = vmatpush1.msra.mxu0 0.0
    %458 = vmatprep.subr.mxu0 0.0
    %459 = vmatpush1.msra.mxu0 0.0
    %460 = vmatprep.subr.mxu0 0.0
    %461 = vmatpush1.msra.mxu0 0.0
    %462 = vmatprep.subr.mxu0 0.0
    %463 = vmatpush1.msra.mxu0 0.0
    %464 = vmatprep.subr.mxu0 0.0
    %465 = vmatpush1.msra.mxu0 0.0
    %466 = vmatprep.subr.mxu0 0.0
    %467 = vmatpush1.msra.mxu0 0.0
    %468 = vmatprep.subr.mxu0 0.0
    %469 = vmatpush1.msra.mxu0 0.0
    %470 = vmatprep.subr.mxu0 0.0
    %471 = vmatpush1.msra.mxu0 0.0
    %472 = vmatprep.subr.mxu0 0.0
    %473 = vmatpush1.msra.mxu0 0.0
    %474 = vmatprep.subr.mxu0 0.0
    %475 = vmatpush1.msra.mxu0 0.0
    %476 = vmatprep.subr.mxu0 0.0
    %477 = vmatpush1.msra.mxu0 0.0
    %478 = vmatprep.subr.mxu0 0.0
    %479 = vmatpush1.msra.mxu0 0.0
    %480 = vmatprep.subr.mxu0 0.0
    %481 = vmatpush1.msra.mxu0 0.0
    %482 = vmatprep.subr.mxu0 0.0
    %483 = vmatpush1.msra.mxu0 0.0
    %484 = vmatprep.subr.mxu0 0.0
    %485 = vmatpush1.msra.mxu0 0.0
    %486 = vmatprep.subr.mxu0 0.0
    %487 = vmatpush1.msra.mxu0 0.0
    %488 = vmatprep.subr.mxu0 0.0
    %489 = vmatpush1.msra.mxu0 0.0
    %490 = vmatprep.subr.mxu0 0.0
    %491 = vmatpush1.msra.mxu0 0.0
    %492 = vmatprep.subr.mxu0 0.0
    %493 = vmatpush1.msra.mxu0 0.0
    %494 = vmatprep.subr.mxu0 0.0
    %495 = vmatpush1.msra.mxu0 0.0
    %496 = vmatprep.mubr.f32.mxu0 0.0
    %v497 = vand.u32 %v51, 4294901760
    %498 = vmatmul.mubr.f32.gmra.mrb[0].mxu0 %v497
    %v499 = vpop.f32.mrb[0].mxu0
    %v500 = vadd.f32 %v428, %v499
    %v501 = vpop.f32.mrb[0].mxu0
    %502 = vdwg.mxu0
    %v503 = vmax.f32 %v500, 0.0
    %v504 = vadd.f32 %v503, 1.0
    %v505 = vlaneseq
    %v506 = vshrl.u32 %v505, 7
    %v507 = vsub.s32 0, %v506
    %v508 = vrot.slane %v44, %v507
    %509 = vmatprep.subr.mxu0 0.0
    %v510 = vand.u32 %v28, 4294901760
    %511 = vmatpush1.msra.mxu0 %v510
    %512 = vmatprep.subr.mxu0 0.0
    %v513 = vand.u32 %v29, 4294901760
    %514 = vmatpush1.msra.mxu0 %v513
    %515 = vmatprep.subr.mxu0 0.0
    %v516 = vand.u32 %v30, 4294901760
    %517 = vmatpush1.msra.mxu0 %v516
    %518 = vmatprep.subr.mxu0 0.0
    %v519 = vand.u32 %v31, 4294901760
    %520 = vmatpush1.msra.mxu0 %v519
    %521 = vmatprep.subr.mxu0 0.0
    %v522 = vand.u32 %v32, 4294901760
    %523 = vmatpush1.msra.mxu0 %v522
    %524 = vmatprep.subr.mxu0 0.0
    %v525 = vand.u32 %v33, 4294901760
    %526 = vmatpush1.msra.mxu0 %v525
    %527 = vmatprep.subr.mxu0 0.0
    %v528 = vand.u32 %v34, 4294901760
    %529 = vmatpush1.msra.mxu0 %v528
    %530 = vmatprep.subr.mxu0 0.0
    %v531 = vand.u32 %v35, 4294901760
    %532 = vmatpush1.msra.mxu0 %v531
    %533 = vmatprep.subr.mxu0 0.0
    %v534 = vand.u32 %v36, 4294901760
    %535 = vmatpush1.msra.mxu0 %v534
    %536 = vmatprep.subr.mxu0 0.0
    %v537 = vand.u32 %v37, 4294901760
    %538 = vmatpush1.msra.mxu0 %v537
    %539 = vmatprep.subr.mxu0 0.0
    %v540 = vand.u32 %v38, 4294901760
    %541 = vmatpush1.msra.mxu0 %v540
    %542 = vmatprep.subr.mxu0 0.0
    %v543 = vand.u32 %v39, 4294901760
    %544 = vmatpush1.msra.mxu0 %v543
    %545 = vmatprep.subr.mxu0 0.0
    %v546 = vand.u32 %v40, 4294901760
    %547 = vmatpush1.msra.mxu0 %v546
    %548 = vmatprep.subr.mxu0 0.0
    %v549 = vand.u32 %v41, 4294901760
    %550 = vmatpush1.msra.mxu0 %v549
    %551 = vmatprep.subr.mxu0 0.0
    %v552 = vand.u32 %v42, 4294901760
    %553 = vmatpush1.msra.mxu0 %v552
    %554 = vmatprep.subr.mxu0 0.0
    %v555 = vand.u32 %v43, 4294901760
    %556 = vmatpush1.msra.mxu0 %v555
    %557 = vmatprep.subr.mxu0 0.0
    %558 = vmatpush1.msra.mxu0 0.0
    %559 = vmatprep.subr.mxu0 0.0
    %560 = vmatpush1.msra.mxu0 0.0
    %561 = vmatprep.subr.mxu0 0.0
    %562 = vmatpush1.msra.mxu0 0.0
    %563 = vmatprep.subr.mxu0 0.0
    %564 = vmatpush1.msra.mxu0 0.0
    %565 = vmatprep.subr.mxu0 0.0
    %566 = vmatpush1.msra.mxu0 0.0
    %567 = vmatprep.subr.mxu0 0.0
    %568 = vmatpush1.msra.mxu0 0.0
    %569 = vmatprep.subr.mxu0 0.0
    %570 = vmatpush1.msra.mxu0 0.0
    %571 = vmatprep.subr.mxu0 0.0
    %572 = vmatpush1.msra.mxu0 0.0
    %573 = vmatprep.subr.mxu0 0.0
    %574 = vmatpush1.msra.mxu0 0.0
    %575 = vmatprep.subr.mxu0 0.0
    %576 = vmatpush1.msra.mxu0 0.0
    %577 = vmatprep.subr.mxu0 0.0
    %578 = vmatpush1.msra.mxu0 0.0
    %579 = vmatprep.subr.mxu0 0.0
    %580 = vmatpush1.msra.mxu0 0.0
    %581 = vmatprep.subr.mxu0 0.0
    %582 = vmatpush1.msra.mxu0 0.0
    %583 = vmatprep.subr.mxu0 0.0
    %584 = vmatpush1.msra.mxu0 0.0
    %585 = vmatprep.subr.mxu0 0.0
    %586 = vmatpush1.msra.mxu0 0.0
    %587 = vmatprep.subr.mxu0 0.0
    %588 = vmatpush1.msra.mxu0 0.0
    %589 = vmatprep.mubr.f32.mxu0 0.0
    %v590 = vand.u32 %v504, 4294901760
    %v591 = vsub.f32 %v504, %v590
    %v592 = vand.u32 %v591, 4294901760
    %v593 = vsub.f32 %v591, %v592
    %v594 = vand.u32 %v593, 4294901760
    %595 = vmatmul.mubr.f32.gmra.mrb[0].mxu0 %v594
    %v596 = vpop.f32.mrb[0].mxu0
    %v597 = vadd.f32 %v508, %v596
    %v598 = vpop.f32.mrb[0].mxu0
    %599 = vdwg.mxu0
    %600 = vmatprep.subr.mxu0 0.0
    %v601 = vand.u32 %v28, 4294901760
    %v602 = vsub.f32 %v28, %v601
    %v603 = vand.u32 %v602, 4294901760
    %v604 = vsub.f32 %v602, %v603
    %v605 = vand.u32 %v604, 4294901760
    %606 = vmatpush1.msra.mxu0 %v605
    %607 = vmatprep.subr.mxu0 0.0
    %v608 = vand.u32 %v29, 4294901760
    %v609 = vsub.f32 %v29, %v608
    %v610 = vand.u32 %v609, 4294901760
    %v611 = vsub.f32 %v609, %v610
    %v612 = vand.u32 %v611, 4294901760
    %613 = vmatpush1.msra.mxu0 %v612
    %614 = vmatprep.subr.mxu0 0.0
    %v615 = vand.u32 %v30, 4294901760
    %v616 = vsub.f32 %v30, %v615
    %v617 = vand.u32 %v616, 4294901760
    %v618 = vsub.f32 %v616, %v617
    %v619 = vand.u32 %v618, 4294901760
    %620 = vmatpush1.msra.mxu0 %v619
    %621 = vmatprep.subr.mxu0 0.0
    %v622 = vand.u32 %v31, 4294901760
    %v623 = vsub.f32 %v31, %v622
    %v624 = vand.u32 %v623, 4294901760
    %v625 = vsub.f32 %v623, %v624
    %v626 = vand.u32 %v625, 4294901760
    %627 = vmatpush1.msra.mxu0 %v626
    %628 = vmatprep.subr.mxu0 0.0
    %v629 = vand.u32 %v32, 4294901760
    %v630 = vsub.f32 %v32, %v629
    %v631 = vand.u32 %v630, 4294901760
    %v632 = vsub.f32 %v630, %v631
    %v633 = vand.u32 %v632, 4294901760
    %634 = vmatpush1.msra.mxu0 %v633
    %635 = vmatprep.subr.mxu0 0.0
    %v636 = vand.u32 %v33, 4294901760
    %v637 = vsub.f32 %v33, %v636
    %v638 = vand.u32 %v637, 4294901760
    %v639 = vsub.f32 %v637, %v638
    %v640 = vand.u32 %v639, 4294901760
    %641 = vmatpush1.msra.mxu0 %v640
    %642 = vmatprep.subr.mxu0 0.0
    %v643 = vand.u32 %v34, 4294901760
    %v644 = vsub.f32 %v34, %v643
    %v645 = vand.u32 %v644, 4294901760
    %v646 = vsub.f32 %v644, %v645
    %v647 = vand.u32 %v646, 4294901760
    %648 = vmatpush1.msra.mxu0 %v647
    %649 = vmatprep.subr.mxu0 0.0
    %v650 = vand.u32 %v35, 4294901760
    %v651 = vsub.f32 %v35, %v650
    %v652 = vand.u32 %v651, 4294901760
    %v653 = vsub.f32 %v651, %v652
    %v654 = vand.u32 %v653, 4294901760
    %655 = vmatpush1.msra.mxu0 %v654
    %656 = vmatprep.subr.mxu0 0.0
    %v657 = vand.u32 %v36, 4294901760
    %v658 = vsub.f32 %v36, %v657
    %v659 = vand.u32 %v658, 4294901760
    %v660 = vsub.f32 %v658, %v659
    %v661 = vand.u32 %v660, 4294901760
    %662 = vmatpush1.msra.mxu0 %v661
    %663 = vmatprep.subr.mxu0 0.0
    %v664 = vand.u32 %v37, 4294901760
    %v665 = vsub.f32 %v37, %v664
    %v666 = vand.u32 %v665, 4294901760
    %v667 = vsub.f32 %v665, %v666
    %v668 = vand.u32 %v667, 4294901760
    %669 = vmatpush1.msra.mxu0 %v668
    %670 = vmatprep.subr.mxu0 0.0
    %v671 = vand.u32 %v38, 4294901760
    %v672 = vsub.f32 %v38, %v671
    %v673 = vand.u32 %v672, 4294901760
    %v674 = vsub.f32 %v672, %v673
    %v675 = vand.u32 %v674, 4294901760
    %676 = vmatpush1.msra.mxu0 %v675
    %677 = vmatprep.subr.mxu0 0.0
    %v678 = vand.u32 %v39, 4294901760
    %v679 = vsub.f32 %v39, %v678
    %v680 = vand.u32 %v679, 4294901760
    %v681 = vsub.f32 %v679, %v680
    %v682 = vand.u32 %v681, 4294901760
    %683 = vmatpush1.msra.mxu0 %v682
    %684 = vmatprep.subr.mxu0 0.0
    %v685 = vand.u32 %v40, 4294901760
    %v686 = vsub.f32 %v40, %v685
    %v687 = vand.u32 %v686, 4294901760
    %v688 = vsub.f32 %v686, %v687
    %v689 = vand.u32 %v688, 4294901760
    %690 = vmatpush1.msra.mxu0 %v689
    %691 = vmatprep.subr.mxu0 0.0
    %v692 = vand.u32 %v41, 4294901760
    %v693 = vsub.f32 %v41, %v692
    %v694 = vand.u32 %v693, 4294901760
    %v695 = vsub.f32 %v693, %v694
    %v696 = vand.u32 %v695, 4294901760
    %697 = vmatpush1.msra.mxu0 %v696
    %698 = vmatprep.subr.mxu0 0.0
    %v699 = vand.u32 %v42, 4294901760
    %v700 = vsub.f32 %v42, %v699
    %v701 = vand.u32 %v700, 4294901760
    %v702 = vsub.f32 %v700, %v701
    %v703 = vand.u32 %v702, 4294901760
    %704 = vmatpush1.msra.mxu0 %v703
    %705 = vmatprep.subr.mxu0 0.0
    %v706 = vand.u32 %v43, 4294901760
    %v707 = vsub.f32 %v43, %v706
    %v708 = vand.u32 %v707, 4294901760
    %v709 = vsub.f32 %v707, %v708
    %v710 = vand.u32 %v709, 4294901760
    %711 = vmatpush1.msra.mxu0 %v710
    %712 = vmatprep.subr.mxu0 0.0
    %713 = vmatpush1.msra.mxu0 0.0
    %714 = vmatprep.subr.mxu0 0.0
    %715 = vmatpush1.msra.mxu0 0.0
    %716 = vmatprep.subr.mxu0 0.0
    %717 = vmatpush1.msra.mxu0 0.0
    %718 = vmatprep.subr.mxu0 0.0
    %719 = vmatpush1.msra.mxu0 0.0
    %720 = vmatprep.subr.mxu0 0.0
    %721 = vmatpush1.msra.mxu0 0.0
    %722 = vmatprep.subr.mxu0 0.0
    %723 = vmatpush1.msra.mxu0 0.0
    %724 = vmatprep.subr.mxu0 0.0
    %725 = vmatpush1.msra.mxu0 0.0
    %726 = vmatprep.subr.mxu0 0.0
    %727 = vmatpush1.msra.mxu0 0.0
    %728 = vmatprep.subr.mxu0 0.0
    %729 = vmatpush1.msra.mxu0 0.0
    %730 = vmatprep.subr.mxu0 0.0
    %731 = vmatpush1.msra.mxu0 0.0
    %732 = vmatprep.subr.mxu0 0.0
    %733 = vmatpush1.msra.mxu0 0.0
    %734 = vmatprep.subr.mxu0 0.0
    %735 = vmatpush1.msra.mxu0 0.0
    %736 = vmatprep.subr.mxu0 0.0
    %737 = vmatpush1.msra.mxu0 0.0
    %738 = vmatprep.subr.mxu0 0.0
    %739 = vmatpush1.msra.mxu0 0.0
    %740 = vmatprep.subr.mxu0 0.0
    %741 = vmatpush1.msra.mxu0 0.0
    %742 = vmatprep.subr.mxu0 0.0
    %743 = vmatpush1.msra.mxu0 0.0
    %744 = vmatprep.mubr.f32.mxu0 0.0
    %v745 = vand.u32 %v504, 4294901760
    %746 = vmatmul.mubr.f32.gmra.mrb[0].mxu0 %v745
    %v747 = vpop.f32.mrb[0].mxu0
    %v748 = vadd.f32 %v597, %v747
    %v749 = vpop.f32.mrb[0].mxu0
    %750 = vdwg.mxu0
    %751 = vmatprep.subr.mxu0 0.0
    %v752 = vand.u32 %v28, 4294901760
    %v753 = vsub.f32 %v28, %v752
    %754 = vmatpush1.msra.mxu0 %v753
    %755 = vmatprep.subr.mxu0 0.0
    %v756 = vand.u32 %v29, 4294901760
    %v757 = vsub.f32 %v29, %v756
    %758 = vmatpush1.msra.mxu0 %v757
    %759 = vmatprep.subr.mxu0 0.0
    %v760 = vand.u32 %v30, 4294901760
    %v761 = vsub.f32 %v30, %v760
    %762 = vmatpush1.msra.mxu0 %v761
    %763 = vmatprep.subr.mxu0 0.0
    %v764 = vand.u32 %v31, 4294901760
    %v765 = vsub.f32 %v31, %v764
    %766 = vmatpush1.msra.mxu0 %v765
    %767 = vmatprep.subr.mxu0 0.0
    %v768 = vand.u32 %v32, 4294901760
    %v769 = vsub.f32 %v32, %v768
    %770 = vmatpush1.msra.mxu0 %v769
    %771 = vmatprep.subr.mxu0 0.0
    %v772 = vand.u32 %v33, 4294901760
    %v773 = vsub.f32 %v33, %v772
    %774 = vmatpush1.msra.mxu0 %v773
    %775 = vmatprep.subr.mxu0 0.0
    %v776 = vand.u32 %v34, 4294901760
    %v777 = vsub.f32 %v34, %v776
    %778 = vmatpush1.msra.mxu0 %v777
    %779 = vmatprep.subr.mxu0 0.0
    %v780 = vand.u32 %v35, 4294901760
    %v781 = vsub.f32 %v35, %v780
    %782 = vmatpush1.msra.mxu0 %v781
    %783 = vmatprep.subr.mxu0 0.0
    %v784 = vand.u32 %v36, 4294901760
    %v785 = vsub.f32 %v36, %v784
    %786 = vmatpush1.msra.mxu0 %v785
    %787 = vmatprep.subr.mxu0 0.0
    %v788 = vand.u32 %v37, 4294901760
    %v789 = vsub.f32 %v37, %v788
    %790 = vmatpush1.msra.mxu0 %v789
    %791 = vmatprep.subr.mxu0 0.0
    %v792 = vand.u32 %v38, 4294901760
    %v793 = vsub.f32 %v38, %v792
    %794 = vmatpush1.msra.mxu0 %v793
    %795 = vmatprep.subr.mxu0 0.0
    %v796 = vand.u32 %v39, 4294901760
    %v797 = vsub.f32 %v39, %v796
    %798 = vmatpush1.msra.mxu0 %v797
    %799 = vmatprep.subr.mxu0 0.0
    %v800 = vand.u32 %v40, 4294901760
    %v801 = vsub.f32 %v40, %v800
    %802 = vmatpush1.msra.mxu0 %v801
    %803 = vmatprep.subr.mxu0 0.0
    %v804 = vand.u32 %v41, 4294901760
    %v805 = vsub.f32 %v41, %v804
    %806 = vmatpush1.msra.mxu0 %v805
    %807 = vmatprep.subr.mxu0 0.0
    %v808 = vand.u32 %v42, 4294901760
    %v809 = vsub.f32 %v42, %v808
    %810 = vmatpush1.msra.mxu0 %v809
    %811 = vmatprep.subr.mxu0 0.0
    %v812 = vand.u32 %v43, 4294901760
    %v813 = vsub.f32 %v43, %v812
    %814 = vmatpush1.msra.mxu0 %v813
    %815 = vmatprep.subr.mxu0 0.0
    %816 = vmatpush1.msra.mxu0 0.0
    %817 = vmatprep.subr.mxu0 0.0
    %818 = vmatpush1.msra.mxu0 0.0
    %819 = vmatprep.subr.mxu0 0.0
    %820 = vmatpush1.msra.mxu0 0.0
    %821 = vmatprep.subr.mxu0 0.0
    %822 = vmatpush1.msra.mxu0 0.0
    %823 = vmatprep.subr.mxu0 0.0
    %824 = vmatpush1.msra.mxu0 0.0
    %825 = vmatprep.subr.mxu0 0.0
    %826 = vmatpush1.msra.mxu0 0.0
    %827 = vmatprep.subr.mxu0 0.0
    %828 = vmatpush1.msra.mxu0 0.0
    %829 = vmatprep.subr.mxu0 0.0
    %830 = vmatpush1.msra.mxu0 0.0
    %831 = vmatprep.subr.mxu0 0.0
    %832 = vmatpush1.msra.mxu0 0.0
    %833 = vmatprep.subr.mxu0 0.0
    %834 = vmatpush1.msra.mxu0 0.0
    %835 = vmatprep.subr.mxu0 0.0
    %836 = vmatpush1.msra.mxu0 0.0
    %837 = vmatprep.subr.mxu0 0.0
    %838 = vmatpush1.msra.mxu0 0.0
    %839 = vmatprep.subr.mxu0 0.0
    %840 = vmatpush1.msra.mxu0 0.0
    %841 = vmatprep.subr.mxu0 0.0
    %842 = vmatpush1.msra.mxu0 0.0
    %843 = vmatprep.subr.mxu0 0.0
    %844 = vmatpush1.msra.mxu0 0.0
    %845 = vmatprep.subr.mxu0 0.0
    %846 = vmatpush1.msra.mxu0 0.0
    %847 = vmatprep.mubr.f32.mxu0 0.0
    %v848 = vand.u32 %v504, 4294901760
    %v849 = vsub.f32 %v504, %v848
    %850 = vmatmul.mubr.f32.gmra.mrb[0].mxu0 %v849
    %v851 = vpop.f32.mrb[0].mxu0
    %v852 = vadd.f32 %v748, %v851
    %v853 = vpop.f32.mrb[0].mxu0
    %854 = vdwg.mxu0
    %855 = vmatprep.subr.mxu0 0.0
    %v856 = vand.u32 %v28, 4294901760
    %857 = vmatpush1.msra.mxu0 %v856
    %858 = vmatprep.subr.mxu0 0.0
    %v859 = vand.u32 %v29, 4294901760
    %860 = vmatpush1.msra.mxu0 %v859
    %861 = vmatprep.subr.mxu0 0.0
    %v862 = vand.u32 %v30, 4294901760
    %863 = vmatpush1.msra.mxu0 %v862
    %864 = vmatprep.subr.mxu0 0.0
    %v865 = vand.u32 %v31, 4294901760
    %866 = vmatpush1.msra.mxu0 %v865
    %867 = vmatprep.subr.mxu0 0.0
    %v868 = vand.u32 %v32, 4294901760
    %869 = vmatpush1.msra.mxu0 %v868
    %870 = vmatprep.subr.mxu0 0.0
    %v871 = vand.u32 %v33, 4294901760
    %872 = vmatpush1.msra.mxu0 %v871
    %873 = vmatprep.subr.mxu0 0.0
    %v874 = vand.u32 %v34, 4294901760
    %875 = vmatpush1.msra.mxu0 %v874
    %876 = vmatprep.subr.mxu0 0.0
    %v877 = vand.u32 %v35, 4294901760
    %878 = vmatpush1.msra.mxu0 %v877
    %879 = vmatprep.subr.mxu0 0.0
    %v880 = vand.u32 %v36, 4294901760
    %881 = vmatpush1.msra.mxu0 %v880
    %882 = vmatprep.subr.mxu0 0.0
    %v883 = vand.u32 %v37, 4294901760
    %884 = vmatpush1.msra.mxu0 %v883
    %885 = vmatprep.subr.mxu0 0.0
    %v886 = vand.u32 %v38, 4294901760
    %887 = vmatpush1.msra.mxu0 %v886
    %888 = vmatprep.subr.mxu0 0.0
    %v889 = vand.u32 %v39, 4294901760
    %890 = vmatpush1.msra.mxu0 %v889
    %891 = vmatprep.subr.mxu0 0.0
    %v892 = vand.u32 %v40, 4294901760
    %893 = vmatpush1.msra.mxu0 %v892
    %894 = vmatprep.subr.mxu0 0.0
    %v895 = vand.u32 %v41, 4294901760
    %896 = vmatpush1.msra.mxu0 %v895
    %897 = vmatprep.subr.mxu0 0.0
    %v898 = vand.u32 %v42, 4294901760
    %899 = vmatpush1.msra.mxu0 %v898
    %900 = vmatprep.subr.mxu0 0.0
    %v901 = vand.u32 %v43, 4294901760
    %902 = vmatpush1.msra.mxu0 %v901
    %903 = vmatprep.subr.mxu0 0.0
    %904 = vmatpush1.msra.mxu0 0.0
    %905 = vmatprep.subr.mxu0 0.0
    %906 = vmatpush1.msra.mxu0 0.0
    %907 = vmatprep.subr.mxu0 0.0
    %908 = vmatpush1.msra.mxu0 0.0
    %909 = vmatprep.subr.mxu0 0.0
    %910 = vmatpush1.msra.mxu0 0.0
    %911 = vmatprep.subr.mxu0 0.0
    %912 = vmatpush1.msra.mxu0 0.0
    %913 = vmatprep.subr.mxu0 0.0
    %914 = vmatpush1.msra.mxu0 0.0
    %915 = vmatprep.subr.mxu0 0.0
    %916 = vmatpush1.msra.mxu0 0.0
    %917 = vmatprep.subr.mxu0 0.0
    %918 = vmatpush1.msra.mxu0 0.0
    %919 = vmatprep.subr.mxu0 0.0
    %920 = vmatpush1.msra.mxu0 0.0
    %921 = vmatprep.subr.mxu0 0.0
    %922 = vmatpush1.msra.mxu0 0.0
    %923 = vmatprep.subr.mxu0 0.0
    %924 = vmatpush1.msra.mxu0 0.0
    %925 = vmatprep.subr.mxu0 0.0
    %926 = vmatpush1.msra.mxu0 0.0
    %927 = vmatprep.subr.mxu0 0.0
    %928 = vmatpush1.msra.mxu0 0.0
    %929 = vmatprep.subr.mxu0 0.0
    %930 = vmatpush1.msra.mxu0 0.0
    %931 = vmatprep.subr.mxu0 0.0
    %932 = vmatpush1.msra.mxu0 0.0
    %933 = vmatprep.subr.mxu0 0.0
    %934 = vmatpush1.msra.mxu0 0.0
    %935 = vmatprep.mubr.f32.mxu0 0.0
    %v936 = vand.u32 %v504, 4294901760
    %v937 = vsub.f32 %v504, %v936
    %v938 = vand.u32 %v937, 4294901760
    %939 = vmatmul.mubr.f32.gmra.mrb[0].mxu0 %v938
    %v940 = vpop.f32.mrb[0].mxu0
    %v941 = vadd.f32 %v852, %v940
    %v942 = vpop.f32.mrb[0].mxu0
    %943 = vdwg.mxu0
    %944 = vmatprep.subr.mxu0 0.0
    %v945 = vand.u32 %v28, 4294901760
    %v946 = vsub.f32 %v28, %v945
    %v947 = vand.u32 %v946, 4294901760
    %948 = vmatpush1.msra.mxu0 %v947
    %949 = vmatprep.subr.mxu0 0.0
    %v950 = vand.u32 %v29, 4294901760
    %v951 = vsub.f32 %v29, %v950
    %v952 = vand.u32 %v951, 4294901760
    %953 = vmatpush1.msra.mxu0 %v952
    %954 = vmatprep.subr.mxu0 0.0
    %v955 = vand.u32 %v30, 4294901760
    %v956 = vsub.f32 %v30, %v955
    %v957 = vand.u32 %v956, 4294901760
    %958 = vmatpush1.msra.mxu0 %v957
    %959 = vmatprep.subr.mxu0 0.0
    %v960 = vand.u32 %v31, 4294901760
    %v961 = vsub.f32 %v31, %v960
    %v962 = vand.u32 %v961, 4294901760
    %963 = vmatpush1.msra.mxu0 %v962
    %964 = vmatprep.subr.mxu0 0.0
    %v965 = vand.u32 %v32, 4294901760
    %v966 = vsub.f32 %v32, %v965
    %v967 = vand.u32 %v966, 4294901760
    %968 = vmatpush1.msra.mxu0 %v967
    %969 = vmatprep.subr.mxu0 0.0
    %v970 = vand.u32 %v33, 4294901760
    %v971 = vsub.f32 %v33, %v970
    %v972 = vand.u32 %v971, 4294901760
    %973 = vmatpush1.msra.mxu0 %v972
    %974 = vmatprep.subr.mxu0 0.0
    %v975 = vand.u32 %v34, 4294901760
    %v976 = vsub.f32 %v34, %v975
    %v977 = vand.u32 %v976, 4294901760
    %978 = vmatpush1.msra.mxu0 %v977
    %979 = vmatprep.subr.mxu0 0.0
    %v980 = vand.u32 %v35, 4294901760
    %v981 = vsub.f32 %v35, %v980
    %v982 = vand.u32 %v981, 4294901760
    %983 = vmatpush1.msra.mxu0 %v982
    %984 = vmatprep.subr.mxu0 0.0
    %v985 = vand.u32 %v36, 4294901760
    %v986 = vsub.f32 %v36, %v985
    %v987 = vand.u32 %v986, 4294901760
    %988 = vmatpush1.msra.mxu0 %v987
    %989 = vmatprep.subr.mxu0 0.0
    %v990 = vand.u32 %v37, 4294901760
    %v991 = vsub.f32 %v37, %v990
    %v992 = vand.u32 %v991, 4294901760
    %993 = vmatpush1.msra.mxu0 %v992
    %994 = vmatprep.subr.mxu0 0.0
    %v995 = vand.u32 %v38, 4294901760
    %v996 = vsub.f32 %v38, %v995
    %v997 = vand.u32 %v996, 4294901760
    %998 = vmatpush1.msra.mxu0 %v997
    %999 = vmatprep.subr.mxu0 0.0
    %v1000 = vand.u32 %v39, 4294901760
    %v1001 = vsub.f32 %v39, %v1000
    %v1002 = vand.u32 %v1001, 4294901760
    %1003 = vmatpush1.msra.mxu0 %v1002
    %1004 = vmatprep.subr.mxu0 0.0
    %v1005 = vand.u32 %v40, 4294901760
    %v1006 = vsub.f32 %v40, %v1005
    %v1007 = vand.u32 %v1006, 4294901760
    %1008 = vmatpush1.msra.mxu0 %v1007
    %1009 = vmatprep.subr.mxu0 0.0
    %v1010 = vand.u32 %v41, 4294901760
    %v1011 = vsub.f32 %v41, %v1010
    %v1012 = vand.u32 %v1011, 4294901760
    %1013 = vmatpush1.msra.mxu0 %v1012
    %1014 = vmatprep.subr.mxu0 0.0
    %v1015 = vand.u32 %v42, 4294901760
    %v1016 = vsub.f32 %v42, %v1015
    %v1017 = vand.u32 %v1016, 4294901760
    %1018 = vmatpush1.msra.mxu0 %v1017
    %1019 = vmatprep.subr.mxu0 0.0
    %v1020 = vand.u32 %v43, 4294901760
    %v1021 = vsub.f32 %v43, %v1020
    %v1022 = vand.u32 %v1021, 4294901760
    %1023 = vmatpush1.msra.mxu0 %v1022
    %1024 = vmatprep.subr.mxu0 0.0
    %1025 = vmatpush1.msra.mxu0 0.0
    %1026 = vmatprep.subr.mxu0 0.0
    %1027 = vmatpush1.msra.mxu0 0.0
    %1028 = vmatprep.subr.mxu0 0.0
    %1029 = vmatpush1.msra.mxu0 0.0
    %1030 = vmatprep.subr.mxu0 0.0
    %1031 = vmatpush1.msra.mxu0 0.0
    %1032 = vmatprep.subr.mxu0 0.0
    %1033 = vmatpush1.msra.mxu0 0.0
    %1034 = vmatprep.subr.mxu0 0.0
    %1035 = vmatpush1.msra.mxu0 0.0
    %1036 = vmatprep.subr.mxu0 0.0
    %1037 = vmatpush1.msra.mxu0 0.0
    %1038 = vmatprep.subr.mxu0 0.0
    %1039 = vmatpush1.msra.mxu0 0.0
    %1040 = vmatprep.subr.mxu0 0.0
    %1041 = vmatpush1.msra.mxu0 0.0
    %1042 = vmatprep.subr.mxu0 0.0
    %1043 = vmatpush1.msra.mxu0 0.0
    %1044 = vmatprep.subr.mxu0 0.0
    %1045 = vmatpush1.msra.mxu0 0.0
    %1046 = vmatprep.subr.mxu0 0.0
    %1047 = vmatpush1.msra.mxu0 0.0
    %1048 = vmatprep.subr.mxu0 0.0
    %1049 = vmatpush1.msra.mxu0 0.0
    %1050 = vmatprep.subr.mxu0 0.0
    %1051 = vmatpush1.msra.mxu0 0.0
    %1052 = vmatprep.subr.mxu0 0.0
    %1053 = vmatpush1.msra.mxu0 0.0
    %1054 = vmatprep.subr.mxu0 0.0
    %1055 = vmatpush1.msra.mxu0 0.0
    %1056 = vmatprep.mubr.f32.mxu0 0.0
    %v1057 = vand.u32 %v504, 4294901760
    %1058 = vmatmul.mubr.f32.gmra.mrb[0].mxu0 %v1057
    %v1059 = vpop.f32.mrb[0].mxu0
    %v1060 = vadd.f32 %v941, %v1059
    %v1061 = vpop.f32.mrb[0].mxu0
    %1062 = vdwg.mxu0
    %1063 = vmatprep.subr.mxu0 0.0
    %v1064 = vand.u32 %v28, 4294901760
    %1065 = vmatpush1.msra.mxu0 %v1064
    %1066 = vmatprep.subr.mxu0 0.0
    %v1067 = vand.u32 %v29, 4294901760
    %1068 = vmatpush1.msra.mxu0 %v1067
    %1069 = vmatprep.subr.mxu0 0.0
    %v1070 = vand.u32 %v30, 4294901760
    %1071 = vmatpush1.msra.mxu0 %v1070
    %1072 = vmatprep.subr.mxu0 0.0
    %v1073 = vand.u32 %v31, 4294901760
    %1074 = vmatpush1.msra.mxu0 %v1073
    %1075 = vmatprep.subr.mxu0 0.0
    %v1076 = vand.u32 %v32, 4294901760
    %1077 = vmatpush1.msra.mxu0 %v1076
    %1078 = vmatprep.subr.mxu0 0.0
    %v1079 = vand.u32 %v33, 4294901760
    %1080 = vmatpush1.msra.mxu0 %v1079
    %1081 = vmatprep.subr.mxu0 0.0
    %v1082 = vand.u32 %v34, 4294901760
    %1083 = vmatpush1.msra.mxu0 %v1082
    %1084 = vmatprep.subr.mxu0 0.0
    %v1085 = vand.u32 %v35, 4294901760
    %1086 = vmatpush1.msra.mxu0 %v1085
    %1087 = vmatprep.subr.mxu0 0.0
    %v1088 = vand.u32 %v36, 4294901760
    %1089 = vmatpush1.msra.mxu0 %v1088
    %1090 = vmatprep.subr.mxu0 0.0
    %v1091 = vand.u32 %v37, 4294901760
    %1092 = vmatpush1.msra.mxu0 %v1091
    %1093 = vmatprep.subr.mxu0 0.0
    %v1094 = vand.u32 %v38, 4294901760
    %1095 = vmatpush1.msra.mxu0 %v1094
    %1096 = vmatprep.subr.mxu0 0.0
    %v1097 = vand.u32 %v39, 4294901760
    %1098 = vmatpush1.msra.mxu0 %v1097
    %1099 = vmatprep.subr.mxu0 0.0
    %v1100 = vand.u32 %v40, 4294901760
    %1101 = vmatpush1.msra.mxu0 %v1100
    %1102 = vmatprep.subr.mxu0 0.0
    %v1103 = vand.u32 %v41, 4294901760
    %1104 = vmatpush1.msra.mxu0 %v1103
    %1105 = vmatprep.subr.mxu0 0.0
    %v1106 = vand.u32 %v42, 4294901760
    %1107 = vmatpush1.msra.mxu0 %v1106
    %1108 = vmatprep.subr.mxu0 0.0
    %v1109 = vand.u32 %v43, 4294901760
    %1110 = vmatpush1.msra.mxu0 %v1109
    %1111 = vmatprep.subr.mxu0 0.0
    %1112 = vmatpush1.msra.mxu0 0.0
    %1113 = vmatprep.subr.mxu0 0.0
    %1114 = vmatpush1.msra.mxu0 0.0
    %1115 = vmatprep.subr.mxu0 0.0
    %1116 = vmatpush1.msra.mxu0 0.0
    %1117 = vmatprep.subr.mxu0 0.0
    %1118 = vmatpush1.msra.mxu0 0.0
    %1119 = vmatprep.subr.mxu0 0.0
    %1120 = vmatpush1.msra.mxu0 0.0
    %1121 = vmatprep.subr.mxu0 0.0
    %1122 = vmatpush1.msra.mxu0 0.0
    %1123 = vmatprep.subr.mxu0 0.0
    %1124 = vmatpush1.msra.mxu0 0.0
    %1125 = vmatprep.subr.mxu0 0.0
    %1126 = vmatpush1.msra.mxu0 0.0
    %1127 = vmatprep.subr.mxu0 0.0
    %1128 = vmatpush1.msra.mxu0 0.0
    %1129 = vmatprep.subr.mxu0 0.0
    %1130 = vmatpush1.msra.mxu0 0.0
    %1131 = vmatprep.subr.mxu0 0.0
    %1132 = vmatpush1.msra.mxu0 0.0
    %1133 = vmatprep.subr.mxu0 0.0
    %1134 = vmatpush1.msra.mxu0 0.0
    %1135 = vmatprep.subr.mxu0 0.0
    %1136 = vmatpush1.msra.mxu0 0.0
    %1137 = vmatprep.subr.mxu0 0.0
    %1138 = vmatpush1.msra.mxu0 0.0
    %1139 = vmatprep.subr.mxu0 0.0
    %1140 = vmatpush1.msra.mxu0 0.0
    %1141 = vmatprep.subr.mxu0 0.0
    %1142 = vmatpush1.msra.mxu0 0.0
    %1143 = vmatprep.mubr.f32.mxu0 0.0
    %v1144 = vand.u32 %v504, 4294901760
    %1145 = vmatmul.mubr.f32.gmra.mrb[0].mxu0 %v1144
    %v1146 = vpop.f32.mrb[0].mxu0
    %v1147 = vadd.f32 %v1060, %v1146
    %v1148 = vpop.f32.mrb[0].mxu0
    %1149 = vdwg.mxu0
    %v1150 = vlaneseq
    %v1151 = vand.u32 %v1150, 127
    %vm1152 = vcmp.lt.s32.totalorder %v1151, 3
    %v1153 = vsel %vm1152, %v1147, -1e+30
    %1154 = vmax.xlane.f32.xlu0 %v1153
    %v1155 = vpop.xlane.xlu0 %1154
    %v1156 = vsub.f32 %v1153, %v1155
    %v1157 = vmul.f32 %v1156, 1.442695
    %v1158 = vpow.pop %v1157
    %1159 = vadd.xlane.f32.xlu0 %v1158
    %v1160 = vpop.xlane.xlu0 %1159
    %v1161 = vrcp.pop %v1160
    %v1162 = vmul.f32 %v1158, %v1161
    %vm1163 = vcmask 23552
    %1164 = vst.msk [vmem:[%s2] sm:$0xff] %vm1163, %v1162
    // Predicated region
    $region14: #{tpu_custom_call.1} parent=1 // pred_check
      _
    $region15: #{tpu_custom_call.1} parent=1 // pred_check_branch
      %1166 = sbr.rel (0) target = $region17
    $region16: #{tpu_custom_call.1} parent=1 // pred_region
      _
    $region17: #{tpu_custom_call.1} parent=1 // pred_fallthru
      _
    // Predicated region
    $region18: #{tpu_custom_call.1} parent=1 // pred_check
      _
    $region19: #{tpu_custom_call.1} parent=1 // pred_check_branch
      %1168 = sbr.rel (0) target = $region21
    $region20: #{tpu_custom_call.1} parent=1 // pred_region
      _
    $region21: #{tpu_custom_call.1} parent=1 // pred_fallthru
      _
    %1169 = vsyncpa [#allocation3], 1

</llo_original>
